<compile_context>
chip_gen: v5e
topology: v5e:2x2
jax: 0.10.0
libtpu: 0.0.40
codegen_flags: <defaults>
</compile_context>

<pallas_src>
import functools

import jax
import jax.numpy as jnp
from jax import lax
from jax.experimental import pallas as pl
from jax.experimental.pallas import tpu as pltpu


LANE = 128       # lane width: pad feature / class dims to multiples of this
TM_MAX = 512     # max encoder row tile (amortizes per-grid-step overhead)
STATS_W = 128    # lane-dense width of the packed (loss, acc) output row


def _round_up(a, b):
    return ((a + b - 1) // b) * b


# ----------------------------------------------------------------------------
# Fused kernel: encoder -> masked mean-pool (accumulated) -> classifier -> CE
# ----------------------------------------------------------------------------
def fused_jigsaw_kernel(x_ref, w_enc_ref, b_enc_ref, pool_ref,
                        w_cls_ref, b_cls_ref, label_ref,
                        stats_ref, logits_ref, pooled_acc,
                        *, num_classes):
    i = pl.program_id(0)

    @pl.when(i == 0)
    def _init():
        pooled_acc[...] = jnp.zeros_like(pooled_acc)

    # --- encoder: bf16 x bf16 -> f32 on the MXU, bias + ReLU ------------------
    feats = jnp.dot(x_ref[...], w_enc_ref[...],
                    preferred_element_type=jnp.float32)          # (TM, Hpad) f32
    feats = jnp.maximum(feats + b_enc_ref[...], 0.0)

    # --- masked mean-pool as a second MXU matmul ------------------------------
    # pool_ref: (bs, TM) query-mask / patch-count weights (zero on padded rows)
    pooled_acc[...] += jnp.dot(pool_ref[...], feats,
                               preferred_element_type=jnp.float32)  # (bs, Hpad)

    # --- last row tile: classifier + softmax CE + accuracy --------------------
    @pl.when(i == pl.num_programs(0) - 1)
    def _finalize():
        pooled = pooled_acc[...]                                   # (bs, Hpad)
        logits = jnp.dot(pooled, w_cls_ref[...],
                         preferred_element_type=jnp.float32)
        logits = logits + b_cls_ref[...]                           # (bs, Cpad)

        # mask padded class columns so softmax / argmax ignore them
        col = lax.broadcasted_iota(jnp.int32, logits.shape, 1)
        logits = jnp.where(col < num_classes, logits, jnp.float32(-1e30))
        logits_ref[...] = logits

        bs = logits.shape[0]
        rowmax = jnp.max(logits, axis=-1, keepdims=True)           # (bs, 1)
        z = logits - rowmax
        lse = jnp.log(jnp.sum(jnp.exp(z), axis=-1, keepdims=True))
        logp = z - lse                                             # (bs, Cpad)

        # one-hot built in-kernel from the int32 labels (no HBM one-hot DMA)
        onehot = (col == label_ref[...]).astype(jnp.float32)       # (bs, Cpad)

        nll = -jnp.sum(onehot * logp, axis=-1, keepdims=True)      # (bs, 1)
        loss = jnp.sum(nll, axis=0, keepdims=True) / bs            # (1, 1)

        hit = jnp.sum(onehot * (logits >= rowmax).astype(jnp.float32),
                      axis=-1, keepdims=True)                      # (bs, 1)
        acc = jnp.sum(hit, axis=0, keepdims=True) / bs             # (1, 1)

        # pack scalars into one lane-dense row: [loss, acc, 0, ...]
        lane = lax.broadcasted_iota(jnp.int32, stats_ref.shape, 1)
        stats_ref[...] = (jnp.where(lane == 0, loss, 0.0)
                          + jnp.where(lane == 1, acc, 0.0))


# ----------------------------------------------------------------------------
# Params + wrapper
# ----------------------------------------------------------------------------
def init_params(key, patch_dim, hidden, num_classes):
    k1, k2 = jax.random.split(key)
    scale_e = 1.0 / jnp.sqrt(jnp.float32(patch_dim))
    scale_c = 1.0 / jnp.sqrt(jnp.float32(hidden))
    return {
        "w_enc": jax.random.normal(k1, (patch_dim, hidden), jnp.float32) * scale_e,
        "b_enc": jnp.zeros((1, hidden), jnp.float32),
        "w_cls": jax.random.normal(k2, (hidden, num_classes), jnp.float32) * scale_c,
        "b_cls": jnp.zeros((1, num_classes), jnp.float32),
    }


def jigsaw_forward(batch_input, params):
    image = batch_input["image"]                # (bs, P, C, H, W) f32
    query = batch_input["query"]                # (bs, P) bool
    label = batch_input["label"]                # (bs,)  int32

    bs, P, C, H, W = image.shape
    D = C * H * W
    hidden = params["w_enc"].shape[1]
    ncls = params["w_cls"].shape[1]

    Hpad = _round_up(hidden, LANE)
    Cpad = _round_up(ncls, LANE)

    # row tiling over the flattened patch axis
    N = bs * P
    TM = _round_up(N, 8) if N <= TM_MAX else TM_MAX
    N_pad = _round_up(N, TM)
    num_tiles = N_pad // TM

    # flatten patches (row-major NCHW) and cast to bf16 for the MXU operand
    x = image.reshape(N, D).astype(jnp.bfloat16)
    x = jnp.pad(x, ((0, N_pad - N), (0, 0)))

    # zero-padded params (padded hidden columns / class columns contribute 0)
    w_enc = jnp.pad(params["w_enc"], ((0, 0), (0, Hpad - hidden))).astype(jnp.bfloat16)
    b_enc = jnp.pad(params["b_enc"], ((0, 0), (0, Hpad - hidden)))
    w_cls = jnp.pad(params["w_cls"], ((0, Hpad - hidden), (0, Cpad - ncls)))
    b_cls = jnp.pad(params["b_cls"], ((0, 0), (0, Cpad - ncls)))

    # pooling matrix (bs, N_pad): pool[b, b*P + p] = query[b,p] / max(count_b, 1)
    maskf = query.astype(jnp.float32)                              # (bs, P)
    denom = jnp.maximum(maskf.sum(axis=1, keepdims=True), 1.0)     # (bs, 1)
    w_flat = (maskf / denom).reshape(N)                            # (N,)
    row_of = jnp.arange(N, dtype=jnp.int32) // P                   # which batch row
    pool = (jnp.arange(bs, dtype=jnp.int32)[:, None] == row_of[None, :])
    pool = pool.astype(jnp.float32) * w_flat[None, :]              # (bs, N)
    pool = jnp.pad(pool, ((0, 0), (0, N_pad - N)))                 # (bs, N_pad)

    label2d = label.reshape(bs, 1).astype(jnp.int32)

    kernel = functools.partial(fused_jigsaw_kernel, num_classes=ncls)

    stats, logits_pad = pl.pallas_call(
        kernel,
        out_shape=(
            jax.ShapeDtypeStruct((1, STATS_W), jnp.float32),
            jax.ShapeDtypeStruct((bs, Cpad), jnp.float32),
        ),
        grid_spec=pltpu.PrefetchScalarGridSpec(
            num_scalar_prefetch=0,
            grid=(num_tiles,),
            in_specs=[
                pl.BlockSpec((TM, D), lambda i: (i, 0)),        # x row tiles
                pl.BlockSpec((D, Hpad), lambda i: (0, 0)),      # w_enc (resident)
                pl.BlockSpec((1, Hpad), lambda i: (0, 0)),      # b_enc
                pl.BlockSpec((bs, TM), lambda i: (0, i)),       # pooling weights
                pl.BlockSpec((Hpad, Cpad), lambda i: (0, 0)),   # w_cls
                pl.BlockSpec((1, Cpad), lambda i: (0, 0)),      # b_cls
                pl.BlockSpec((bs, 1), lambda i: (0, 0)),        # labels (int32)
            ],
            out_specs=(
                pl.BlockSpec((1, STATS_W), lambda i: (0, 0)),   # [loss, acc, ...]
                pl.BlockSpec((bs, Cpad), lambda i: (0, 0)),     # logits (padded)
            ),
            scratch_shapes=[pltpu.VMEM((bs, Hpad), jnp.float32)],   # pooled acc
        ),
        compiler_params=pltpu.CompilerParams(
            # the row-tile axis reduces into pooled_acc -> not parallel
            dimension_semantics=("arbitrary",),
        ),
    )(x, w_enc, b_enc, pool, w_cls, b_cls, label2d)

    return {
        "loss": stats[0, 0],
        "jigsaw_acc": stats[0, 1],
        "logits": logits_pad[:, :ncls],
    }


# ----------------------------------------------------------------------------
# Pure-JAX reference (same bf16-storage / f32-accumulate encoder semantics)
# ----------------------------------------------------------------------------
def jigsaw_forward_ref(batch_input, params):
    hi = jax.lax.Precision.HIGHEST
    image = batch_input["image"]
    query = batch_input["query"].astype(jnp.float32)
    label = batch_input["label"]
    bs, P, C, H, W = image.shape
    x = image.reshape(bs * P, C * H * W).astype(jnp.bfloat16).astype(jnp.float32)
    w_enc = params["w_enc"].astype(jnp.bfloat16).astype(jnp.float32)
    feats = jnp.maximum(jnp.dot(x, w_enc, precision=hi) + params["b_enc"], 0.0)
    feats = feats.reshape(bs, P, -1)
    denom = jnp.maximum(query.sum(1, keepdims=True), 1.0)
    pooled = (feats * query[:, :, None]).sum(1) / denom
    logits = jnp.dot(pooled, params["w_cls"], precision=hi) + params["b_cls"]
    logp = jax.nn.log_softmax(logits, axis=-1)
    loss = -jnp.mean(logp[jnp.arange(bs), label])
    acc = jnp.mean((jnp.argmax(logits, -1) == label).astype(jnp.float32))
    return loss, acc, logits


if __name__ == "__main__":
    key = jax.random.PRNGKey(0)
    k_img, k_q, k_lbl, k_p = jax.random.split(key, 4)

    bs, num_patches, C, H, W = 2, 9, 3, 8, 8     # 3x3 jigsaw puzzle, small patches
    hidden, num_classes = 32, 24                 # 24 sampled permutation classes

    image = jax.random.normal(k_img, (bs, num_patches, C, H, W), jnp.float32)
    query = jax.random.bernoulli(k_q, 0.5, (bs, num_patches))
    query = query.at[:, 0].set(True)             # at least one queried patch / sample
    label = jax.random.randint(k_lbl, (bs,), 0, num_classes, jnp.int32)

    params = init_params(k_p, C * H * W, hidden, num_classes)

    batch_input = {
        "idx": jnp.arange(bs, dtype=jnp.int32),
        "image": image,
        "query": query,
        "label": label,
    }

    out = jigsaw_forward(batch_input, params)
    jax.block_until_ready(out)

    ref_loss, ref_acc, ref_logits = jigsaw_forward_ref(batch_input, params)
    assert jnp.allclose(out["loss"], ref_loss, atol=5e-3, rtol=5e-3)
    assert jnp.allclose(out["jigsaw_acc"], ref_acc, atol=1e-6)
    assert jnp.allclose(out["logits"], ref_logits, atol=5e-3, rtol=5e-3)

    print("KERNEL_OK")
</pallas_src>

<mosaic_0001>
module attributes {stable_mosaic.version = 11 : i64} {
  func.func @fused_jigsaw_kernel(%arg0: i32, %arg1: memref<24x192xbf16, #tpu.memory_space<vmem>>, %arg2: memref<192x128xbf16, #tpu.memory_space<vmem>>, %arg3: memref<1x128xf32, #tpu.memory_space<vmem>>, %arg4: memref<2x24xf32, #tpu.memory_space<vmem>>, %arg5: memref<128x128xf32, #tpu.memory_space<vmem>>, %arg6: memref<1x128xf32, #tpu.memory_space<vmem>>, %arg7: memref<2x1xi32, #tpu.memory_space<vmem>>, %arg8: memref<1x128xf32, #tpu.memory_space<vmem>>, %arg9: memref<2x128xf32, #tpu.memory_space<vmem>>, %arg10: memref<2x128xf32, #tpu.memory_space<vmem>>) attributes {dimension_semantics = [#tpu.dimension_semantics<arbitrary>], iteration_bounds = array<i64: 1>, scalar_prefetch = 0 : i64, scratch_operands = 1 : i64, tpu.core_type = #tpu.core_type<tc>, window_params = [{transform_indices = @transform_0, window_bounds = array<i64: 24, 192>}, {pipeline_mode = #tpu.pipeline_mode<synchronous>, transform_indices = @transform_1, window_bounds = array<i64: 192, 128>}, {pipeline_mode = #tpu.pipeline_mode<synchronous>, transform_indices = @transform_2, window_bounds = array<i64: 1, 128>}, {transform_indices = @transform_3, window_bounds = array<i64: 2, 24>}, {pipeline_mode = #tpu.pipeline_mode<synchronous>, transform_indices = @transform_4, window_bounds = array<i64: 128, 128>}, {pipeline_mode = #tpu.pipeline_mode<synchronous>, transform_indices = @transform_5, window_bounds = array<i64: 1, 128>}, {pipeline_mode = #tpu.pipeline_mode<synchronous>, transform_indices = @transform_6, window_bounds = array<i64: 2, 1>}, {pipeline_mode = #tpu.pipeline_mode<synchronous>, transform_indices = @transform_7, window_bounds = array<i64: 1, 128>}, {pipeline_mode = #tpu.pipeline_mode<synchronous>, transform_indices = @transform_8, window_bounds = array<i64: 2, 128>}]} {
    %c0_i32 = arith.constant 0 : i32
    %0 = arith.cmpi eq, %arg0, %c0_i32 : i32
    %1 = arith.extui %0 : i1 to i32
    %c0_i32_0 = arith.constant 0 : i32
    %2 = arith.cmpi ne, %1, %c0_i32_0 : i32
    scf.if %2 {
      %cst_16 = arith.constant 0.000000e+00 : f32
      %19 = vector.broadcast %cst_16 : f32 to vector<2x128xf32>
      %c0_17 = arith.constant 0 : index
      %c0_18 = arith.constant 0 : index
      %20 = vector.load %arg10[%c0_17, %c0_18] : memref<2x128xf32, #tpu.memory_space<vmem>>, vector<2x128xf32>
      tpu.vector_store %arg10[%c0_17, %c0_18], %19 {strides = array<i32>} : memref<2x128xf32, #tpu.memory_space<vmem>>, vector<2x128xf32>,
    } else {
    }
    %c0 = arith.constant 0 : index
    %c0_1 = arith.constant 0 : index
    %3 = vector.load %arg1[%c0, %c0_1] : memref<24x192xbf16, #tpu.memory_space<vmem>>, vector<24x192xbf16>
    %c0_2 = arith.constant 0 : index
    %c0_3 = arith.constant 0 : index
    %4 = vector.load %arg2[%c0_2, %c0_3] : memref<192x128xbf16, #tpu.memory_space<vmem>>, vector<192x128xbf16>
    %cst = arith.constant dense<0.000000e+00> : vector<24x128xf32>
    %5 = tpu.matmul %3, %4, %cst {dimension_numbers = #tpu.dot_dimension_numbers<[1], [0], [0], [1], [0, 0, 1, 1], [], []>} : vector<24x192xbf16>, vector<192x128xbf16>, vector<24x128xf32> -> vector<24x128xf32>
    %c0_4 = arith.constant 0 : index
    %c0_5 = arith.constant 0 : index
    %6 = vector.load %arg3[%c0_4, %c0_5] : memref<1x128xf32, #tpu.memory_space<vmem>>, vector<1x128xf32>
    %7 = vector.broadcast %6 : vector<1x128xf32> to vector<24x128xf32>
    %8 = arith.addf %5, %7 : vector<24x128xf32>
    %cst_6 = arith.constant 0.000000e+00 : f32
    %9 = vector.broadcast %cst_6 : f32 to vector<24x128xf32>
    %10 = arith.maximumf %8, %9 : vector<24x128xf32>
    %c0_7 = arith.constant 0 : index
    %c0_8 = arith.constant 0 : index
    %11 = vector.load %arg10[%c0_7, %c0_8] : memref<2x128xf32, #tpu.memory_space<vmem>>, vector<2x128xf32>
    %c0_9 = arith.constant 0 : index
    %c0_10 = arith.constant 0 : index
    %12 = vector.load %arg4[%c0_9, %c0_10] : memref<2x24xf32, #tpu.memory_space<vmem>>, vector<2x24xf32>
    %cst_11 = arith.constant dense<0.000000e+00> : vector<2x128xf32>
    %13 = tpu.matmul %12, %10, %cst_11 {dimension_numbers = #tpu.dot_dimension_numbers<[1], [0], [0], [1], [0, 0, 1, 1], [], []>} : vector<2x24xf32>, vector<24x128xf32>, vector<2x128xf32> -> vector<2x128xf32>
    %14 = arith.addf %11, %13 : vector<2x128xf32>
    %c0_12 = arith.constant 0 : index
    %c0_13 = arith.constant 0 : index
    %15 = vector.load %arg10[%c0_12, %c0_13] : memref<2x128xf32, #tpu.memory_space<vmem>>, vector<2x128xf32>
    tpu.vector_store %arg10[%c0_12, %c0_13], %14 {strides = array<i32>} : memref<2x128xf32, #tpu.memory_space<vmem>>, vector<2x128xf32>,
    %c0_i32_14 = arith.constant 0 : i32
    %16 = arith.cmpi eq, %arg0, %c0_i32_14 : i32
    %17 = arith.extui %16 : i1 to i32
    %c0_i32_15 = arith.constant 0 : i32
    %18 = arith.cmpi ne, %17, %c0_i32_15 : i32
    scf.if %18 {
      %c0_16 = arith.constant 0 : index
      %c0_17 = arith.constant 0 : index
      %19 = vector.load %arg10[%c0_16, %c0_17] : memref<2x128xf32, #tpu.memory_space<vmem>>, vector<2x128xf32>
      %c0_18 = arith.constant 0 : index
      %c0_19 = arith.constant 0 : index
      %20 = vector.load %arg5[%c0_18, %c0_19] : memref<128x128xf32, #tpu.memory_space<vmem>>, vector<128x128xf32>
      %cst_20 = arith.constant dense<0.000000e+00> : vector<2x128xf32>
      %21 = tpu.matmul %19, %20, %cst_20 {dimension_numbers = #tpu.dot_dimension_numbers<[1], [0], [0], [1], [0, 0, 1, 1], [], []>} : vector<2x128xf32>, vector<128x128xf32>, vector<2x128xf32> -> vector<2x128xf32>
      %c0_21 = arith.constant 0 : index
      %c0_22 = arith.constant 0 : index
      %22 = vector.load %arg6[%c0_21, %c0_22] : memref<1x128xf32, #tpu.memory_space<vmem>>, vector<1x128xf32>
      %23 = vector.broadcast %22 : vector<1x128xf32> to vector<2x128xf32>
      %24 = arith.addf %21, %23 : vector<2x128xf32>
      %25 = tpu.iota {dimensions = array<i32: 1>} : vector<2x128xi32>
      %c24_i32 = arith.constant 24 : i32
      %26 = vector.broadcast %c24_i32 : i32 to vector<2x128xi32>
      %27 = arith.cmpi slt, %25, %26 : vector<2x128xi32>
      %cst_23 = arith.constant -1.000000e+30 : f32
      %28 = vector.broadcast %cst_23 : f32 to vector<2x128xf32>
      %29 = arith.select %27, %24, %28 : vector<2x128xi1>, vector<2x128xf32>
      %c0_24 = arith.constant 0 : index
      %c0_25 = arith.constant 0 : index
      %30 = vector.load %arg9[%c0_24, %c0_25] : memref<2x128xf32, #tpu.memory_space<vmem>>, vector<2x128xf32>
      tpu.vector_store %arg9[%c0_24, %c0_25], %29 {strides = array<i32>} : memref<2x128xf32, #tpu.memory_space<vmem>>, vector<2x128xf32>,
      %cst_26 = arith.constant dense<0xFF800000> : vector<2xf32>
      %31 = vector.multi_reduction <maximumf>, %29, %cst_26 [1] : vector<2x128xf32> to vector<2xf32>
      %32 = vector.shape_cast %31 : vector<2xf32> to vector<2x1xf32>
      %33 = vector.broadcast %32 : vector<2x1xf32> to vector<2x128xf32>
      %34 = arith.subf %29, %33 : vector<2x128xf32>
      %35 = math.exp %34 : vector<2x128xf32>
      %cst_27 = arith.constant dense<0.000000e+00> : vector<2xf32>
      %36 = vector.multi_reduction <add>, %35, %cst_27 [1] : vector<2x128xf32> to vector<2xf32>
      %37 = vector.shape_cast %36 : vector<2xf32> to vector<2x1xf32>
      %38 = math.log %37 : vector<2x1xf32>
      %39 = vector.broadcast %38 : vector<2x1xf32> to vector<2x128xf32>
      %40 = arith.subf %34, %39 : vector<2x128xf32>
      %c0_28 = arith.constant 0 : index
      %c0_29 = arith.constant 0 : index
      %41 = vector.load %arg7[%c0_28, %c0_29] : memref<2x1xi32, #tpu.memory_space<vmem>>, vector<2x1xi32>
      %42 = vector.broadcast %41 : vector<2x1xi32> to vector<2x128xi32>
      %43 = arith.cmpi eq, %25, %42 : vector<2x128xi32>
      %44 = arith.extui %43 : vector<2x128xi1> to vector<2x128xi32>
      %45 = arith.sitofp %44 : vector<2x128xi32> to vector<2x128xf32>
      %46 = arith.mulf %45, %40 : vector<2x128xf32>
      %cst_30 = arith.constant dense<0.000000e+00> : vector<2xf32>
      %47 = vector.multi_reduction <add>, %46, %cst_30 [1] : vector<2x128xf32> to vector<2xf32>
      %48 = vector.shape_cast %47 : vector<2xf32> to vector<2x1xf32>
      %cst_31 = arith.constant 0.000000e+00 : f32
      %49 = vector.broadcast %cst_31 : f32 to vector<2x1xf32>
      %50 = arith.subf %49, %48 : vector<2x1xf32>
      %cst_32 = arith.constant dense<0.000000e+00> : vector<1xf32>
      %51 = vector.multi_reduction <add>, %50, %cst_32 [0] : vector<2x1xf32> to vector<1xf32>
      %52 = vector.shape_cast %51 : vector<1xf32> to vector<1x1xf32>
      %cst_33 = arith.constant 2.000000e+00 : f32
      %53 = vector.broadcast %cst_33 : f32 to vector<1x1xf32>
      %54 = arith.divf %52, %53 : vector<1x1xf32>
      %55 = vector.broadcast %32 : vector<2x1xf32> to vector<2x128xf32>
      %56 = arith.cmpf oge, %29, %55 : vector<2x128xf32>
      %57 = arith.extui %56 : vector<2x128xi1> to vector<2x128xi32>
      %58 = arith.sitofp %57 : vector<2x128xi32> to vector<2x128xf32>
      %59 = arith.mulf %45, %58 : vector<2x128xf32>
      %cst_34 = arith.constant dense<0.000000e+00> : vector<2xf32>
      %60 = vector.multi_reduction <add>, %59, %cst_34 [1] : vector<2x128xf32> to vector<2xf32>
      %61 = vector.shape_cast %60 : vector<2xf32> to vector<2x1xf32>
      %cst_35 = arith.constant dense<0.000000e+00> : vector<1xf32>
      %62 = vector.multi_reduction <add>, %61, %cst_35 [0] : vector<2x1xf32> to vector<1xf32>
      %63 = vector.shape_cast %62 : vector<1xf32> to vector<1x1xf32>
      %cst_36 = arith.constant 2.000000e+00 : f32
      %64 = vector.broadcast %cst_36 : f32 to vector<1x1xf32>
      %65 = arith.divf %63, %64 : vector<1x1xf32>
      %66 = tpu.iota {dimensions = array<i32: 1>} : vector<1x128xi32>
      %c0_i32_37 = arith.constant 0 : i32
      %67 = vector.broadcast %c0_i32_37 : i32 to vector<1x128xi32>
      %68 = arith.cmpi eq, %66, %67 : vector<1x128xi32>
      %cst_38 = arith.constant 0.000000e+00 : f32
      %69 = vector.shape_cast %54 : vector<1x1xf32> to vector<1x1xf32>
      %70 = vector.broadcast %69 : vector<1x1xf32> to vector<1x128xf32>
      %71 = vector.broadcast %cst_38 : f32 to vector<1x128xf32>
      %72 = arith.select %68, %70, %71 : vector<1x128xi1>, vector<1x128xf32>
      %c1_i32 = arith.constant 1 : i32
      %73 = vector.broadcast %c1_i32 : i32 to vector<1x128xi32>
      %74 = arith.cmpi eq, %66, %73 : vector<1x128xi32>
      %cst_39 = arith.constant 0.000000e+00 : f32
      %75 = vector.shape_cast %65 : vector<1x1xf32> to vector<1x1xf32>
      %76 = vector.broadcast %75 : vector<1x1xf32> to vector<1x128xf32>
      %77 = vector.broadcast %cst_39 : f32 to vector<1x128xf32>
      %78 = arith.select %74, %76, %77 : vector<1x128xi1>, vector<1x128xf32>
      %79 = arith.addf %72, %78 : vector<1x128xf32>
      %c0_40 = arith.constant 0 : index
      %c0_41 = arith.constant 0 : index
      %80 = vector.load %arg8[%c0_40, %c0_41] : memref<1x128xf32, #tpu.memory_space<vmem>>, vector<1x128xf32>
      tpu.vector_store %arg8[%c0_40, %c0_41], %79 {strides = array<i32>} : memref<1x128xf32, #tpu.memory_space<vmem>>, vector<1x128xf32>,
    } else {
    }
    return
  }
  func.func @transform_0(%arg0: i32) -> (i32, i32) {
    %c0_i32 = arith.constant 0 : i32
    %c0_i32_0 = arith.constant 0 : i32
    return %arg0, %c0_i32 : i32, i32
  }
  func.func @transform_1(%arg0: i32) -> (i32, i32) {
    %c0_i32 = arith.constant 0 : i32
    %c0_i32_0 = arith.constant 0 : i32
    %c0_i32_1 = arith.constant 0 : i32
    return %c0_i32, %c0_i32_0 : i32, i32
  }
  func.func @transform_2(%arg0: i32) -> (i32, i32) {
    %c0_i32 = arith.constant 0 : i32
    %c0_i32_0 = arith.constant 0 : i32
    %c0_i32_1 = arith.constant 0 : i32
    return %c0_i32, %c0_i32_0 : i32, i32
  }
  func.func @transform_3(%arg0: i32) -> (i32, i32) {
    %c0_i32 = arith.constant 0 : i32
    %c0_i32_0 = arith.constant 0 : i32
    return %c0_i32, %arg0 : i32, i32
  }
  func.func @transform_4(%arg0: i32) -> (i32, i32) {
    %c0_i32 = arith.constant 0 : i32
    %c0_i32_0 = arith.constant 0 : i32
    %c0_i32_1 = arith.constant 0 : i32
    return %c0_i32, %c0_i32_0 : i32, i32
  }
  func.func @transform_5(%arg0: i32) -> (i32, i32) {
    %c0_i32 = arith.constant 0 : i32
    %c0_i32_0 = arith.constant 0 : i32
    %c0_i32_1 = arith.constant 0 : i32
    return %c0_i32, %c0_i32_0 : i32, i32
  }
  func.func @transform_6(%arg0: i32) -> (i32, i32) {
    %c0_i32 = arith.constant 0 : i32
    %c0_i32_0 = arith.constant 0 : i32
    %c0_i32_1 = arith.constant 0 : i32
    return %c0_i32, %c0_i32_0 : i32, i32
  }
  func.func @transform_7(%arg0: i32) -> (i32, i32) {
    %c0_i32 = arith.constant 0 : i32
    %c0_i32_0 = arith.constant 0 : i32
    %c0_i32_1 = arith.constant 0 : i32
    return %c0_i32, %c0_i32_0 : i32, i32
  }
  func.func @transform_8(%arg0: i32) -> (i32, i32) {
    %c0_i32 = arith.constant 0 : i32
    %c0_i32_0 = arith.constant 0 : i32
    %c0_i32_1 = arith.constant 0 : i32
    return %c0_i32, %c0_i32_0 : i32, i32
  }
}

</mosaic_0001>

<llo_original>
// kernel: tpu_custom_call.1
$region0: #{tpu_custom_call.1}
  #allocation0 [shape = 'u32[]', space=smem, size = 0x4, offset = 0x4, fixed_abs, tag = 'smem constant byte address 0x4 - core index']
  #allocation1 [shape = 'u32[72,128]{1,0:T(1,128)}', space=vmem, size = 0x9000, scoped, tag = 'internal scratch']
  #allocation2 [shape = 'f32[2,128]{1,0:T(2,128)}', space=vmem, size = 0x400, scoped, tag = 'scratch operand']
  %s0 = inlined_call_operand.hbm [shape: bf16[24,192], index: 0, kind: input, shape index: {}]
  %s1 = inlined_call_operand.hbm [shape: bf16[192,128], index: 1, kind: input, shape index: {}]
  %s2 = inlined_call_operand.vmem [shape: f32[1,128], index: 2, kind: input, shape index: {}]
  %s3 = inlined_call_operand.vmem [shape: f32[2,24], index: 3, kind: input, shape index: {}]
  %s4 = inlined_call_operand.hbm [shape: f32[128,128], index: 4, kind: input, shape index: {}]
  %s5 = inlined_call_operand.vmem [shape: f32[1,128], index: 5, kind: input, shape index: {}]
  %s6 = inlined_call_operand.vmem [shape: s32[2,1], index: 6, kind: input, shape index: {}]
  %s7 = inlined_call_operand.hbm [shape: f32[1,128], index: 7, kind: output, shape index: {0}]
  %s8 = inlined_call_operand.hbm [shape: f32[2,128], index: 8, kind: output, shape index: {1}]
  %9 = xla_tuple %s7, %s8
  %s10 = sld [smem:[#allocation0]]
  $region66: #{tpu_custom_call.1} parent=0
    _
  %s12 = ssub.s32 1, %s10
  %s13 = scalar_select 0, %s12, %s10
  $region1: #{tpu_custom_call.1} parent=0
    #allocation3 [shape = 'u8[12288]{0}', space=vmem, size = 0x3000, scoped, tag = 'input window, operand 0, single buffered']
    #allocation4 [shape = 's32[1]{0}', space=sflag, size = 0x4, scoped, tag = 'scoped memory for tpu_custom_call.1']
    #allocation5 [shape = 's32[1]{0}', space=sflag, size = 0x4, scoped, tag = 'scoped memory for tpu_custom_call.1']
    #allocation6 [shape = 'u8[49152]{0}', space=vmem, size = 0xc000, scoped, tag = 'input window, operand 1, single buffered']
    #allocation7 [shape = 's32[1]{0}', space=sflag, size = 0x4, scoped, tag = 'scoped memory for tpu_custom_call.1']
    #allocation8 [shape = 'u8[65536]{0}', space=vmem, size = 0x10000, scoped, tag = 'input window, operand 4, single buffered']
    #allocation9 [shape = 'u8[512]{0}', space=vmem, size = 0x400, scoped, tag = 'output window, operand 0, single buffered']
    #allocation10 [shape = 'u8[1024]{0}', space=vmem, size = 0x400, scoped, tag = 'output window, operand 1, single buffered']
    #allocation11 [shape = 's32[1]{0}', space=sflag, size = 0x4, scoped, tag = 'scoped memory for tpu_custom_call.1']
    %14 = vsyncpa [#allocation4], 0
    %15 = vsyncpa [#allocation7], 0
    %16 = vsyncpa [#allocation5], 0
    %17 = vsyncpa [#allocation11], 0
    // Predicated region
    $region2: #{tpu_custom_call.1} parent=1 // pred_check
      _
    $region3: #{tpu_custom_call.1} parent=1 // pred_check_branch
      %19 = sbr.rel (0) target = $region5
    $region4: #{tpu_custom_call.1} parent=1 // pred_region
      %21 = vsyncadd [#allocation4], 0
      %s22 = sshll.u32 %s0, 4
      %s23 = int_to_ptr.hbm [resolvable:$true] %s22
      %s24 = sshll.u32 [#allocation3], 4
      %s25 = int_to_ptr.vmem [resolvable:$true] %s24
      %30 = dma.hbm_to_vmem [thread:$0]  %s23, 384, %s25, [#allocation4], 128, 128, 8
    $region5: #{tpu_custom_call.1} parent=1 // pred_fallthru
      _
    // Predicated region
    $region6: #{tpu_custom_call.1} parent=1 // pred_check
      _
    $region7: #{tpu_custom_call.1} parent=1 // pred_check_branch
      %32 = sbr.rel (0) target = $region9
    $region8: #{tpu_custom_call.1} parent=1 // pred_region
      %34 = vsyncadd [#allocation7], 0
      %s35 = sshll.u32 %s1, 4
      %s36 = int_to_ptr.hbm [resolvable:$true] %s35
      %s37 = sshll.u32 [#allocation6], 4
      %s38 = int_to_ptr.vmem [resolvable:$true] %s37
      %43 = dma.hbm_to_vmem [thread:$0]  %s36, 1536, %s38, [#allocation7], 64, 64, 4
    $region9: #{tpu_custom_call.1} parent=1 // pred_fallthru
      _
    // Predicated region
    $region10: #{tpu_custom_call.1} parent=1 // pred_check
      _
    $region11: #{tpu_custom_call.1} parent=1 // pred_check_branch
      %45 = sbr.rel (0) target = $region13
    $region12: #{tpu_custom_call.1} parent=1 // pred_region
      _
    $region13: #{tpu_custom_call.1} parent=1 // pred_fallthru
      _
    // Predicated region
    $region14: #{tpu_custom_call.1} parent=1 // pred_check
      _
    $region15: #{tpu_custom_call.1} parent=1 // pred_check_branch
      %47 = sbr.rel (0) target = $region17
    $region16: #{tpu_custom_call.1} parent=1 // pred_region
      _
    $region17: #{tpu_custom_call.1} parent=1 // pred_fallthru
      _
    // Predicated region
    $region18: #{tpu_custom_call.1} parent=1 // pred_check
      _
    $region19: #{tpu_custom_call.1} parent=1 // pred_check_branch
      %49 = sbr.rel (0) target = $region21
    $region20: #{tpu_custom_call.1} parent=1 // pred_region
      %51 = vsyncadd [#allocation7], 0
      %s52 = sshll.u32 %s4, 4
      %s53 = int_to_ptr.hbm [resolvable:$true] %s52
      %s54 = sshll.u32 [#allocation8], 4
      %s55 = int_to_ptr.vmem [resolvable:$true] %s54
      %60 = dma.hbm_to_vmem [thread:$0]  %s53, 2048, %s55, [#allocation7], 128, 128, 8
    $region21: #{tpu_custom_call.1} parent=1 // pred_fallthru
      _
    // Predicated region
    $region22: #{tpu_custom_call.1} parent=1 // pred_check
      _
    $region23: #{tpu_custom_call.1} parent=1 // pred_check_branch
      %62 = sbr.rel (0) target = $region25
    $region24: #{tpu_custom_call.1} parent=1 // pred_region
      _
    $region25: #{tpu_custom_call.1} parent=1 // pred_fallthru
      _
    // Predicated region
    $region26: #{tpu_custom_call.1} parent=1 // pred_check
      _
    $region27: #{tpu_custom_call.1} parent=1 // pred_check_branch
      %64 = sbr.rel (0) target = $region29
    $region28: #{tpu_custom_call.1} parent=1 // pred_region
      _
    $region29: #{tpu_custom_call.1} parent=1 // pred_fallthru
      _
    // Predicated region
    $region30: #{tpu_custom_call.1} parent=1 // pred_check
      _
    $region31: #{tpu_custom_call.1} parent=1 // pred_check_branch
      %66 = sbr.rel (0) target = $region33
    $region32: #{tpu_custom_call.1} parent=1 // pred_region
      %68 = dma.done [#allocation4], 384
    $region33: #{tpu_custom_call.1} parent=1 // pred_fallthru
      _
    // Predicated region
    $region34: #{tpu_custom_call.1} parent=1 // pred_check
      _
    $region35: #{tpu_custom_call.1} parent=1 // pred_check_branch
      %70 = sbr.rel (0) target = $region37
    $region36: #{tpu_custom_call.1} parent=1 // pred_region
      %72 = dma.done [#allocation7], 1536
    $region37: #{tpu_custom_call.1} parent=1 // pred_fallthru
      _
    // Predicated region
    $region38: #{tpu_custom_call.1} parent=1 // pred_check
      _
    $region39: #{tpu_custom_call.1} parent=1 // pred_check_branch
      %74 = sbr.rel (0) target = $region41
    $region40: #{tpu_custom_call.1} parent=1 // pred_region
      %76 = dma.done [#allocation7], 2048
    $region41: #{tpu_custom_call.1} parent=1 // pred_fallthru
      _
    %p78 = scmp.eq.s32.totalorder 0, 0
    // Predicated region
    $region42: #{tpu_custom_call.1} parent=1 // pred_check
      %p79 = pneg %p78
    $region43: #{tpu_custom_call.1} parent=1 // pred_check_branch
      %81 = sbr.rel (%p79) target = $region45
    $region44: #{tpu_custom_call.1} parent=1 // pred_region
      %82 = vst [vmem:[#allocation2] sm:$0x3] 0.0
    $region45: #{tpu_custom_call.1} parent=1 // pred_fallthru
      _
    %v83 = vld [vmem:[#allocation3] sm:$0xff]
    %v84 = vld [vmem:[#allocation3 + $0x8] sm:$0xff]
    %v85 = vld [vmem:[#allocation3 + $0x10] sm:$0xff]
    %v86 = vld [vmem:[#allocation6] sm:$0xf]
    %v87 = vld [vmem:[#allocation6 + $0x4] sm:$0xf]
    %v88 = vld [vmem:[#allocation6 + $0x8] sm:$0xf]
    %v89 = vld [vmem:[#allocation6 + $0xc] sm:$0xf]
    %v90 = vld [vmem:[#allocation6 + $0x10] sm:$0xf]
    %v91 = vld [vmem:[#allocation6 + $0x14] sm:$0xf]
    %v92 = vld [vmem:[#allocation6 + $0x18] sm:$0xf]
    %v93 = vld [vmem:[#allocation6 + $0x1c] sm:$0xf]
    %v94 = vld [vmem:[#allocation6 + $0x20] sm:$0xf]
    %v95 = vld [vmem:[#allocation6 + $0x24] sm:$0xf]
    %v96 = vld [vmem:[#allocation6 + $0x28] sm:$0xf]
    %v97 = vld [vmem:[#allocation6 + $0x2c] sm:$0xf]
    %v98 = vld [vmem:[#allocation6 + $0x30] sm:$0xf]
    %v99 = vld [vmem:[#allocation6 + $0x34] sm:$0xf]
    %v100 = vld [vmem:[#allocation6 + $0x38] sm:$0xf]
    %v101 = vld [vmem:[#allocation6 + $0x3c] sm:$0xf]
    %v102 = vld [vmem:[#allocation6 + $0x40] sm:$0xf]
    %v103 = vld [vmem:[#allocation6 + $0x44] sm:$0xf]
    %v104 = vld [vmem:[#allocation6 + $0x48] sm:$0xf]
    %v105 = vld [vmem:[#allocation6 + $0x4c] sm:$0xf]
    %v106 = vld [vmem:[#allocation6 + $0x50] sm:$0xf]
    %v107 = vld [vmem:[#allocation6 + $0x54] sm:$0xf]
    %v108 = vld [vmem:[#allocation6 + $0x58] sm:$0xf]
    %v109 = vld [vmem:[#allocation6 + $0x5c] sm:$0xf]
    %v110 = vld [vmem:[%s2] sm:$0x1]
    %v112 = vperm.slane %v110, 0
    %v117 = vunpack.c.l.b16 %v83
    %v118 = vunpack.c.h.b16 %v83
    %v119 = vunpack.c.l.b16 %v84
    %v120 = vunpack.c.h.b16 %v84
    %v121 = vunpack.c.l.b16 %v85
    %v122 = vunpack.c.h.b16 %v85
    %v123 = vpack.c.b16 %v119, %v117
    %v124 = vpack.c.b16 %v120, %v118
    %v125 = vpack.c.b16 %v121, %v121
    %v126 = vpack.c.b16 %v122, %v122
    %v153 = vunpack.c.l.b16 %v86
    %v154 = vunpack.c.l.b16 %v87
    %v155 = vunpack.c.l.b16 %v88
    %v156 = vunpack.c.l.b16 %v89
    %v157 = vunpack.c.l.b16 %v90
    %v158 = vunpack.c.l.b16 %v91
    %v159 = vunpack.c.l.b16 %v92
    %v160 = vunpack.c.l.b16 %v93
    %v161 = vunpack.c.l.b16 %v94
    %v162 = vunpack.c.l.b16 %v95
    %v163 = vunpack.c.l.b16 %v96
    %v164 = vunpack.c.l.b16 %v97
    %v165 = vunpack.c.l.b16 %v98
    %v166 = vunpack.c.l.b16 %v99
    %v167 = vunpack.c.l.b16 %v100
    %v168 = vunpack.c.l.b16 %v101
    %v169 = vunpack.c.l.b16 %v102
    %v170 = vunpack.c.l.b16 %v103
    %v171 = vunpack.c.l.b16 %v104
    %v172 = vunpack.c.l.b16 %v105
    %v173 = vunpack.c.l.b16 %v106
    %v174 = vunpack.c.l.b16 %v107
    %v175 = vunpack.c.l.b16 %v108
    %v176 = vunpack.c.l.b16 %v109
    %v177 = vpack.c.b16 %v154, %v153
    %v178 = vpack.c.b16 %v156, %v155
    %v179 = vpack.c.b16 %v158, %v157
    %v180 = vpack.c.b16 %v160, %v159
    %v181 = vpack.c.b16 %v162, %v161
    %v182 = vpack.c.b16 %v164, %v163
    %v183 = vpack.c.b16 %v166, %v165
    %v184 = vpack.c.b16 %v168, %v167
    %v185 = vpack.c.b16 %v170, %v169
    %v186 = vpack.c.b16 %v172, %v171
    %v187 = vpack.c.b16 %v174, %v173
    %v188 = vpack.c.b16 %v176, %v175
    %vm201 = vcmask 523264
    %v203 = vsel %vm201, %v124, 0
    %v206 = vsel %vm201, %v126, 0
    %208 = vmatpush.bf16.msra.mxu0 %v184
    %209 = vmatpush.bf16.msra.mxu0 %v183
    %210 = vmatpush.bf16.msra.mxu0 %v182
    %211 = vmatpush.bf16.msra.mxu0 %v181
    %212 = vmatpush.bf16.msra.mxu0 %v180
    %213 = vmatpush.bf16.msra.mxu0 %v179
    %214 = vmatpush.bf16.msra.mxu0 %v178
    %215 = vmatpush.bf16.msra.mxu0 %v177
    %216 = vmatmul.bf16.gmra.mxu0 %v123
    %v217 = vpop.f32.mrf.mxu0
    %v218 = vadd.f32 %v112, %v217
    %v219 = vpop.f32.mrf.mxu0
    %v220 = vadd.f32 %v112, %v219
    %221 = vmatmul.bf16.gmra.mxu0 %v125
    %v222 = vpop.f32.mrf.mxu0
    %v223 = vadd.f32 %v112, %v222
    %v224 = vpop.f32.mrf.mxu0
    %225 = vdwg.mxu0
    %226 = vmatpush.bf16.msra.mxu0 0
    %227 = vmatpush.bf16.msra.mxu0 0
    %228 = vmatpush.bf16.msra.mxu0 0
    %229 = vmatpush.bf16.msra.mxu0 0
    %230 = vmatpush.bf16.msra.mxu0 %v188
    %231 = vmatpush.bf16.msra.mxu0 %v187
    %232 = vmatpush.bf16.msra.mxu0 %v186
    %233 = vmatpush.bf16.msra.mxu0 %v185
    %234 = vmatmul.bf16.gmra.mxu0 %v203
    %v235 = vpop.f32.mrf.mxu0
    %v236 = vadd.f32 %v218, %v235
    %v237 = vpop.f32.mrf.mxu0
    %v238 = vadd.f32 %v220, %v237
    %239 = vmatmul.bf16.gmra.mxu0 %v206
    %v240 = vpop.f32.mrf.mxu0
    %v241 = vadd.f32 %v223, %v240
    %v242 = vpop.f32.mrf.mxu0
    %243 = vdwg.mxu0
    %v244 = vmax.f32 %v236, 0.0
    %v245 = vmax.f32 %v238, 0.0
    %v246 = vmax.f32 %v241, 0.0
    %v247 = vld [vmem:[#allocation2] sm:$0x3]
    %v248 = vld [vmem:[%s3] sm:$0x3]
    %vm249 = vcmask 195584
    %v251 = vsel %vm249, %v248, 0
    %253 = vmatpush.msra.mxu0 0.0
    %254 = vmatpush.msra.mxu0 0.0
    %255 = vmatpush.msra.mxu0 0.0
    %256 = vmatpush.msra.mxu0 0.0
    %257 = vmatpush.msra.mxu0 0.0
    %258 = vmatpush.msra.mxu0 0.0
    %259 = vmatpush.msra.mxu0 0.0
    %260 = vmatpush.msra.mxu0 0.0
    %261 = vmatpush.msra.mxu0 0.0
    %262 = vmatpush.msra.mxu0 0.0
    %263 = vmatpush.msra.mxu0 0.0
    %264 = vmatpush.msra.mxu0 0.0
    %265 = vmatpush.msra.mxu0 0.0
    %266 = vmatpush.msra.mxu0 %v246
    %267 = vmatpush.msra.mxu0 %v245
    %268 = vmatpush.msra.mxu0 %v244
    %269 = vmatmul.f32.gmra.mxu0 %v251
    %v270 = vpop.f32.mrf.mxu0
    %v271 = vadd.f32 0.0, %v270
    %272 = vdwg.mxu0
    %v273 = vadd.f32 %v247, %v271
    %274 = vst [vmem:[#allocation2] sm:$0x3] %v273
    // Predicated region
    $region46: #{tpu_custom_call.1} parent=1 // pred_check
      %p275 = pneg %p78
    $region47: #{tpu_custom_call.1} parent=1 // pred_check_branch
      %277 = sbr.rel (%p275) target = $region49
    $region48: #{tpu_custom_call.1} parent=1 // pred_region
      %v278 = vld [vmem:[#allocation2] sm:$0x3]
      %v279 = vld [vmem:[#allocation8] sm:$0xff]
      %v280 = vld [vmem:[#allocation8 + $0x8] sm:$0xff]
      %v281 = vld [vmem:[#allocation8 + $0x10] sm:$0xff]
      %v282 = vld [vmem:[#allocation8 + $0x18] sm:$0xff]
      %v283 = vld [vmem:[#allocation8 + $0x20] sm:$0xff]
      %v284 = vld [vmem:[#allocation8 + $0x28] sm:$0xff]
      %v285 = vld [vmem:[#allocation8 + $0x30] sm:$0xff]
      %v286 = vld [vmem:[#allocation8 + $0x38] sm:$0xff]
      %v287 = vld [vmem:[#allocation8 + $0x40] sm:$0xff]
      %v288 = vld [vmem:[#allocation8 + $0x48] sm:$0xff]
      %v289 = vld [vmem:[#allocation8 + $0x50] sm:$0xff]
      %v290 = vld [vmem:[#allocation8 + $0x58] sm:$0xff]
      %v291 = vld [vmem:[#allocation8 + $0x60] sm:$0xff]
      %v292 = vld [vmem:[#allocation8 + $0x68] sm:$0xff]
      %v293 = vld [vmem:[#allocation8 + $0x70] sm:$0xff]
      %v294 = vld [vmem:[#allocation8 + $0x78] sm:$0xff]
      %v295 = vld [vmem:[%s5] sm:$0x1]
      %v297 = vperm.slane %v295, 0
      %299 = vmatpush.msra.mxu0 %v294
      %300 = vmatpush.msra.mxu0 %v293
      %301 = vmatpush.msra.mxu0 %v292
      %302 = vmatpush.msra.mxu0 %v291
      %303 = vmatpush.msra.mxu0 %v290
      %304 = vmatpush.msra.mxu0 %v289
      %305 = vmatpush.msra.mxu0 %v288
      %306 = vmatpush.msra.mxu0 %v287
      %307 = vmatpush.msra.mxu0 %v286
      %308 = vmatpush.msra.mxu0 %v285
      %309 = vmatpush.msra.mxu0 %v284
      %310 = vmatpush.msra.mxu0 %v283
      %311 = vmatpush.msra.mxu0 %v282
      %312 = vmatpush.msra.mxu0 %v281
      %313 = vmatpush.msra.mxu0 %v280
      %314 = vmatpush.msra.mxu0 %v279
      %315 = vmatmul.f32.gmra.mxu0 %v278
      %v316 = vpop.f32.mrf.mxu0
      %v317 = vadd.f32 %v297, %v316
      %318 = vdwg.mxu0
      %v319 = vlaneseq
      %v320 = vand.u32 %v319, 127
      %vm321 = vcmp.lt.s32.totalorder %v320, 24
      %v322 = vsel %vm321, %v317, -1e+30
      %323 = vst [vmem:[#allocation10] sm:$0x3] %v322
      %vm324 = vcmask 1041408
      %v325 = vsel %vm324, %v322, -inf
      %326 = vmax.xlane.f32.xlu0 %v325
      %v327 = vpop.xlane.xlu0 %326
      %v328 = vsub.f32 %v322, %v327
      %v329 = vmul.f32 %v328, 1.442695
      %v330 = vpow.pop %v329
      %v331 = vsel %vm324, %v330, 0.0
      %332 = vadd.xlane.f32.xlu0 %v331
      %v333 = vpop.xlane.xlu0 %332
      %v334 = vlog2.pop %v333
      %v335 = vmul.f32 %v334, 0.6931472
      %v336 = vsub.f32 %v328, %v335
      %v337 = vld [vmem:[%s6] sm:$0x3]
      %338 = vset.pattern.permute.xlu0 0
      %339 = vperm.xlu0 %338, %v337
      %v340 = vpop.permute.xlu0 %339
      %vm341 = vcmp.eq.s32.totalorder %v320, %v340
      %v342 = vsel %vm341, 1, 0
      %v343 = vcvt.s32.f32 %v342
      %v344 = vmul.f32 %v343, %v336
      %v345 = vsel %vm324, %v344, 0.0
      %346 = vadd.xlane.f32.xlu0 %v345
      %v347 = vpop.xlane.xlu0 %346
      %v348 = vsub.f32 0.0, %v347
      %v349 = vsel %vm324, %v348, 0.0
      %v350 = vrot.slane %v349, 4
      %v351 = vadd.f32 %v349, %v350
      %v352 = vrot.slane %v351, 2
      %v353 = vadd.f32 %v351, %v352
      %v354 = vrot.slane %v353, 1
      %v355 = vadd.f32 %v353, %v354
      %v356 = vrcp.pop 2.0
      %v357 = vmul.f32 2.0, %v356
      %v358 = vsub.f32 1.0, %v357
      %v359 = vmul.f32 %v356, %v358
      %v360 = vadd.f32 %v356, %v359
      %vm361 = vweird.f32 %v356
      %v362 = vsel %vm361, %v356, %v360
      %v363 = vmul.f32 %v355, %v362
      %vm364 = vcmp.ge.f32.partialorder %v322, %v327
      %v365 = vsel %vm364, 1, 0
      %v366 = vcvt.s32.f32 %v365
      %v367 = vmul.f32 %v343, %v366
      %v368 = vsel %vm324, %v367, 0.0
      %369 = vadd.xlane.f32.xlu0 %v368
      %v370 = vpop.xlane.xlu0 %369
      %v371 = vsel %vm324, %v370, 0.0
      %v372 = vrot.slane %v371, 4
      %v373 = vadd.f32 %v371, %v372
      %v374 = vrot.slane %v373, 2
      %v375 = vadd.f32 %v373, %v374
      %v376 = vrot.slane %v375, 1
      %v377 = vadd.f32 %v375, %v376
      %v378 = vmul.f32 %v377, %v362
      %vm379 = vcmp.eq.s32.totalorder %v320, 0
      %v380 = vsel %vm379, %v363, 0.0
      %vm381 = vcmp.eq.s32.totalorder %v320, 1
      %v382 = vsel %vm381, %v378, 0.0
      %v383 = vadd.f32 %v380, %v382
      %384 = vst [vmem:[#allocation9] sm:$0x1] %v383
    $region49: #{tpu_custom_call.1} parent=1 // pred_fallthru
      _
    // Predicated region
    $region50: #{tpu_custom_call.1} parent=1 // pred_check
      _
    $region51: #{tpu_custom_call.1} parent=1 // pred_check_branch
      %386 = sbr.rel (0) target = $region53
    $region52: #{tpu_custom_call.1} parent=1 // pred_region
      %388 = vsyncadd [#allocation5], 0
      %s390 = sshll.u32 [#allocation9], 4
      %s391 = int_to_ptr.vmem [resolvable:$true] %s390
      %s392 = sshll.u32 %s7, 4
      %s393 = int_to_ptr.hbm [resolvable:$true] %s392
      %395 = dma.vmem_to_hbm [thread:$0]  %s391, 16, %s393, [#allocation5]
    $region53: #{tpu_custom_call.1} parent=1 // pred_fallthru
      _
    // Predicated region
    $region54: #{tpu_custom_call.1} parent=1 // pred_check
      _
    $region55: #{tpu_custom_call.1} parent=1 // pred_check_branch
      %397 = sbr.rel (0) target = $region57
    $region56: #{tpu_custom_call.1} parent=1 // pred_region
      %399 = vsyncadd [#allocation11], 0
      %s401 = sshll.u32 [#allocation10], 4
      %s402 = int_to_ptr.vmem [resolvable:$true] %s401
      %s403 = sshll.u32 %s8, 4
      %s404 = int_to_ptr.hbm [resolvable:$true] %s403
      %406 = dma.vmem_to_hbm [thread:$0]  %s402, 32, %s404, [#allocation11]
    $region57: #{tpu_custom_call.1} parent=1 // pred_fallthru
      _
    // Predicated region
    $region58: #{tpu_custom_call.1} parent=1 // pred_check
      _
    $region59: #{tpu_custom_call.1} parent=1 // pred_check_branch
      %408 = sbr.rel (0) target = $region61
    $region60: #{tpu_custom_call.1} parent=1 // pred_region
      %410 = dma.done [#allocation5], 16
    $region61: #{tpu_custom_call.1} parent=1 // pred_fallthru
      _
    // Predicated region
    $region62: #{tpu_custom_call.1} parent=1 // pred_check
      _
    $region63: #{tpu_custom_call.1} parent=1 // pred_check_branch
      %412 = sbr.rel (0) target = $region65
    $region64: #{tpu_custom_call.1} parent=1 // pred_region
      %414 = dma.done [#allocation11], 32
    $region65: #{tpu_custom_call.1} parent=1 // pred_fallthru
      _
    %415 = vsyncpa [#allocation4], 1
    %416 = vsyncpa [#allocation7], 1
    %417 = vsyncpa [#allocation5], 1
    %418 = vsyncpa [#allocation11], 1

</llo_original>
